<compile_context>
chip_gen: v7x
topology: tpu7x:2x2x1
jax: 0.10.0
libtpu: 0.0.40
codegen_flags: <defaults>
</compile_context>

<pallas_src>
import math

import jax
import jax.numpy as jnp
from jax.experimental import pallas as pl
from jax.experimental.pallas import tpu as pltpu

_MIB = 1 << 20


# ---------------------------------------------------------------------------
# Kernel
# ---------------------------------------------------------------------------
def _zero_kernel(x_ref, o_ref):
    # y = 0 * x.  Multiplying (instead of writing plain zeros) preserves the exact
    # PyTorch semantics (NaN/Inf inputs propagate to NaN, signed zeros preserved).
    zero = jnp.zeros((), dtype=o_ref.dtype)
    o_ref[...] = x_ref[...] * zero


# ---------------------------------------------------------------------------
# Trace-time helpers (pure Python)
# ---------------------------------------------------------------------------
def _cdiv(a, b):
    return -(-a // b)


def _round_up(a, b):
    return _cdiv(a, b) * b


def _chip_profile():
    """Best-effort chip detection -> (target_tile_bytes, vmem_cap_bytes, num_tensorcores)."""
    kind = ""
    try:
        kind = jax.devices()[0].device_kind.lower()
    except Exception:
        pass
    if "v7" in kind:
        # v7x: 64 MiB VMEM per TC, ~3.2 TB/s HBM, 2 TensorCores per chip.
        return 8 * _MIB, 40 * _MIB, 2
    if "v6" in kind:
        # v6e: 128 MiB VMEM, ~1.4 TB/s HBM, 1 TensorCore.
        return 8 * _MIB, 48 * _MIB, 1
    # v5e / unknown: conservative (stays well clear of the 16 MiB default scoped limit).
    return 4 * _MIB, 32 * _MIB, 1


def _pick_cols(m, sub, max_lane=4096):
    """Largest power-of-two multiple of 128 dividing m (prefer views with rows >= sub)."""
    best = None
    best_full = None
    c = 128
    while c <= min(max_lane, m):
        if m % c == 0:
            best = c
            if (m // c) >= sub:
                best_full = c
        c *= 2
    return best_full if best_full is not None else best


def _pick_row_tile(rows, cols, itemsize, sub, target_tile_bytes, num_tc, vmem_cap):
    """Row-tile (multiple of `sub`) for a (rows, cols) view, megacore aware."""
    row_bytes = cols * itemsize
    tr_max = max(sub, (target_tile_bytes // row_bytes) // sub * sub)
    tr = min(_round_up(rows, sub), tr_max)
    if num_tc < 2:
        return tr  # single TensorCore: biggest fitting tile, never force a split

    # v7x megacore: the "parallel" grid axis is sharded across 2 TCs -> prefer an
    # even number of grid steps so neither core idles on the last step.
    total_bytes = rows * row_bytes
    steps = _cdiv(rows, tr)
    if steps == 1:
        if total_bytes >= 512 * 1024 and rows > sub:
            tr = max(sub, _round_up(_cdiv(rows, 2), sub))  # two ~equal halves
        return tr
    if steps % 2 == 0:
        return tr
    tile_cap = min(int(1.5 * target_tile_bytes), vmem_cap // 5)
    for s in (steps - 1, steps + 1):  # try a bigger tile first, then a smaller one
        if s < 2:
            continue
        t = max(sub, _round_up(_cdiv(rows, s), sub))
        if t * row_bytes <= tile_cap and _cdiv(rows, t) % 2 == 0:
            return t
    return tr


# ---------------------------------------------------------------------------
# Wrapper
# ---------------------------------------------------------------------------
def zero_layer(x, *, min_pallas_bytes=64 * 1024, target_tile_bytes=None):
    """Pallas ZeroLayer forward: returns 0 * x with the original shape/dtype."""
    shape = x.shape
    dtype = x.dtype
    m = math.prod(shape) if shape else 1
    itemsize = jnp.dtype(dtype).itemsize
    total_bytes = m * itemsize
    zero = jnp.zeros((), dtype=dtype)

    # Tiny inputs: custom-call launch + pipeline prologue dwarfs the <1 us of HBM
    # traffic; XLA's fused elementwise path is strictly faster (still exact 0 * x).
    if total_bytes < min_pallas_bytes:
        return x * zero

    # Dtype-aware sublane multiple: sub-32-bit dtypes pack rows per vreg sublane.
    sub = 8 * max(1, 4 // itemsize)  # 8 for f32, 16 for bf16/f16, 32 for int8/fp8

    cols = _pick_cols(m, sub)
    if cols is None:
        # Element count has no multiple-of-128 factor: a lane-dense tile would need
        # an extra HBM padding copy, so just let XLA handle it (still exact 0 * x).
        return x * zero

    rows = m // cols
    profile_tile, vmem_cap, num_tc = _chip_profile()
    if target_tile_bytes is None:
        target_tile_bytes = profile_tile

    tr = _pick_row_tile(rows, cols, itemsize, sub, target_tile_bytes, num_tc, vmem_cap)
    grid = (_cdiv(rows, tr),)  # partial last block is masked on store

    # Scoped-VMEM budget: 2 input buffers + 2 output buffers (default double
    # buffering) plus ~30% headroom, clamped to a per-chip-safe cap.
    tile_bytes = tr * cols * itemsize
    vmem_limit = min(vmem_cap, max(16 * _MIB, int(4 * tile_bytes * 1.3)))

    out2 = pl.pallas_call(
        _zero_kernel,
        out_shape=jax.ShapeDtypeStruct((rows, cols), dtype),
        grid=grid,
        in_specs=[pl.BlockSpec((tr, cols), lambda i: (i, 0))],
        out_specs=pl.BlockSpec((tr, cols), lambda i: (i, 0)),
        compiler_params=pltpu.CompilerParams(
            dimension_semantics=("parallel",),
            vmem_limit_bytes=vmem_limit,
        ),
    )(x.reshape(rows, cols))  # contiguous reshape, no HBM transpose

    return out2.reshape(shape)


# ---------------------------------------------------------------------------
if __name__ == "__main__":
    # Shapes implied by the module: NCHW activations, small NAS-style sizes.
    N, C, H, W = 2, 4, 16, 16
    x = jax.random.normal(jax.random.PRNGKey(0), (N, C, H, W), jnp.float32)
    ref = x * jnp.zeros((), x.dtype)

    # 1) Default path (tiny input -> plain-JAX fast path).
    y_fast = jax.block_until_ready(zero_layer(x))
    assert y_fast.shape == x.shape and y_fast.dtype == x.dtype
    assert jnp.array_equal(y_fast, ref)

    # 2) Force the Pallas kernel on the same module-sized input.
    y_kern = jax.block_until_ready(zero_layer(x, min_pallas_bytes=0))
    assert y_kern.shape == x.shape and y_kern.dtype == x.dtype
    assert jnp.array_equal(y_kern, ref)

    # 3) NaN propagation through the kernel (torch `0 * x` semantics).
    x_nan = x.at[0, 0, 0, 0].set(jnp.nan)
    y_nan = jax.block_until_ready(zero_layer(x_nan, min_pallas_bytes=0))
    assert bool(jnp.isnan(y_nan[0, 0, 0, 0]))
    assert jnp.array_equal(y_nan.ravel()[1:], ref.ravel()[1:])

    # 4) bf16 activation whose row count is not a multiple of the sublane tile:
    #    exercises the cdiv grid with a masked partial last block.
    x2 = jax.random.normal(jax.random.PRNGKey(1), (4, 32, 24, 24), jnp.bfloat16)
    y2 = jax.block_until_ready(zero_layer(x2, min_pallas_bytes=0))
    assert y2.shape == x2.shape and y2.dtype == x2.dtype
    assert jnp.array_equal(y2, x2 * jnp.zeros((), x2.dtype))

    # 5) Multi-step pipelined grid (small tile hint forces several grid steps).
    x3 = jax.random.normal(jax.random.PRNGKey(2), (8, 16, 32, 32), jnp.float32)
    y3 = jax.block_until_ready(
        zero_layer(x3, min_pallas_bytes=0, target_tile_bytes=64 * 1024))
    assert jnp.array_equal(y3, x3 * jnp.zeros((), x3.dtype))

    # 6) Awkward element count (no multiple-of-128 factor) -> safe fallback path.
    x4 = jax.random.normal(jax.random.PRNGKey(3), (3, 5, 7, 11), jnp.float32)
    y4 = jax.block_until_ready(zero_layer(x4, min_pallas_bytes=0))
    assert jnp.array_equal(y4, x4 * jnp.zeros((), x4.dtype))

    print("KERNEL_OK")
</pallas_src>

<mosaic_0001>
module attributes {stable_mosaic.version = 11 : i64} {
  func.func @_zero_kernel(%arg0: i32, %arg1: memref<8x256xf32, #tpu.memory_space<vmem>>, %arg2: memref<8x256xf32, #tpu.memory_space<vmem>>) attributes {dimension_semantics = [#tpu.dimension_semantics<parallel>], iteration_bounds = array<i64: 1>, scalar_prefetch = 0 : i64, scratch_operands = 0 : i64, tpu.core_type = #tpu.core_type<tc>, window_params = [{transform_indices = @transform_0, window_bounds = array<i64: 8, 256>}, {transform_indices = @transform_1, window_bounds = array<i64: 8, 256>}]} {
    %c0 = arith.constant 0 : index
    %c0_0 = arith.constant 0 : index
    %0 = vector.load %arg1[%c0, %c0_0] : memref<8x256xf32, #tpu.memory_space<vmem>>, vector<8x256xf32>
    %cst = arith.constant 0.000000e+00 : f32
    %1 = vector.broadcast %cst : f32 to vector<8x256xf32>
    %2 = arith.mulf %0, %1 : vector<8x256xf32>
    %c0_1 = arith.constant 0 : index
    %c0_2 = arith.constant 0 : index
    %3 = vector.load %arg2[%c0_1, %c0_2] : memref<8x256xf32, #tpu.memory_space<vmem>>, vector<8x256xf32>
    tpu.vector_store %arg2[%c0_1, %c0_2], %2 {strides = array<i32>} : memref<8x256xf32, #tpu.memory_space<vmem>>, vector<8x256xf32>,
    return
  }
  func.func @transform_0(%arg0: i32) -> (i32, i32) {
    %c0_i32 = arith.constant 0 : i32
    %c0_i32_0 = arith.constant 0 : i32
    return %arg0, %c0_i32 : i32, i32
  }
  func.func @transform_1(%arg0: i32) -> (i32, i32) {
    %c0_i32 = arith.constant 0 : i32
    %c0_i32_0 = arith.constant 0 : i32
    return %arg0, %c0_i32 : i32, i32
  }
}

</mosaic_0001>

<llo_original>
// kernel: tpu_custom_call.1
$region0: #{tpu_custom_call.1}
  #allocation0 [shape = 'u32[]', space=smem, size = 0x4, offset = 0x4, fixed_abs, tag = 'smem constant byte address 0x4 - core index']
  #allocation1 [shape = 'u32[144,128]{1,0:T(1,128)}', space=vmem, size = 0x12000, scoped, tag = 'internal scratch']
  %s0 = inlined_call_operand.hbm [shape: f32[8,256], index: 0, kind: input, shape index: {}]
  %s1 = inlined_call_operand.hbm [shape: f32[8,256], index: 1, kind: output, shape index: {}]
  %s2 = sld [smem:[#allocation0]]
  $region18: #{tpu_custom_call.1} parent=0
    _
  %s4 = ssub.s32 1, %s2
  %s5 = scalar_select 0, %s4, %s2
  $region1: #{tpu_custom_call.1} parent=0
    #allocation2 [shape = 'u8[8192]{0}', space=vmem, size = 0x2000, scoped, tag = 'input window, operand 0, single buffered']
    #allocation3 [shape = 's32[1]{0}', space=sflag, size = 0x4, scoped, tag = 'scoped memory for tpu_custom_call.1']
    #allocation4 [shape = 's32[1]{0}', space=sflag, size = 0x4, scoped, tag = 'scoped memory for tpu_custom_call.1']
    #allocation5 [shape = 'u8[8192]{0}', space=vmem, size = 0x2000, scoped, tag = 'output window, operand 0, single buffered']
    %6 = vsyncpa [#allocation3], 0
    %7 = vsyncpa [#allocation4], 0
    // Predicated region
    $region2: #{tpu_custom_call.1} parent=1 // pred_check
      _
    $region3: #{tpu_custom_call.1} parent=1 // pred_check_branch
      %9 = sbr.rel (0) target = $region5
    $region4: #{tpu_custom_call.1} parent=1 // pred_region
      %s11 = ssub.s32 256, 256
      %12 = vsyncadd [#allocation3], %s11
      %s14 = sshll.u32 [#allocation2], 4
      %s15 = int_to_ptr.vmem [resolvable:$true] %s14
      %17 = dma.hbm_to_vmem [thread:$0]  %s0, 256, %s15, [#allocation3]
    $region5: #{tpu_custom_call.1} parent=1 // pred_fallthru
      _
    // Predicated region
    $region6: #{tpu_custom_call.1} parent=1 // pred_check
      _
    $region7: #{tpu_custom_call.1} parent=1 // pred_check_branch
      %19 = sbr.rel (0) target = $region9
    $region8: #{tpu_custom_call.1} parent=1 // pred_region
      %20 = dma.done [#allocation3], 256
    $region9: #{tpu_custom_call.1} parent=1 // pred_fallthru
      _
    %v21 = vld [vmem:[#allocation2] sm:$0xff]
    %v22 = vld [vmem:[#allocation2 + $0x8] sm:$0xff]
    %v23 = vmul.f32 %v21, 0.0
    %v24 = vmul.f32 %v22, 0.0
    %25 = vst [vmem:[#allocation5] sm:$0xff] %v23
    %26 = vst [vmem:[#allocation5 + $0x8] sm:$0xff] %v24
    // Predicated region
    $region10: #{tpu_custom_call.1} parent=1 // pred_check
      _
    $region11: #{tpu_custom_call.1} parent=1 // pred_check_branch
      %28 = sbr.rel (0) target = $region13
    $region12: #{tpu_custom_call.1} parent=1 // pred_region
      %s30 = ssub.s32 256, 256
      %31 = vsyncadd [#allocation4], %s30
      %s33 = sshll.u32 [#allocation5], 4
      %s34 = int_to_ptr.vmem [resolvable:$true] %s33
      %36 = dma.vmem_to_hbm [thread:$0]  %s34, 256, %s1, [#allocation4]
    $region13: #{tpu_custom_call.1} parent=1 // pred_fallthru
      _
    // Predicated region
    $region14: #{tpu_custom_call.1} parent=1 // pred_check
      _
    $region15: #{tpu_custom_call.1} parent=1 // pred_check_branch
      %38 = sbr.rel (0) target = $region17
    $region16: #{tpu_custom_call.1} parent=1 // pred_region
      %39 = dma.done [#allocation4], 256
    $region17: #{tpu_custom_call.1} parent=1 // pred_fallthru
      _
    %40 = vsyncpa [#allocation3], 1
    %41 = vsyncpa [#allocation4], 1

</llo_original>
